<compile_context>
chip_gen: v7x
topology: tpu7x:2x2x1
jax: 0.10.0
libtpu: 0.0.40
codegen_flags: <defaults>
</compile_context>

<pallas_src>
import functools

import jax
import jax.numpy as jnp
from jax.experimental import pallas as pl
from jax.experimental.pallas import tpu as pltpu

BN_EPS = 1e-5


# ------------------------------------------------------------------ shared excite math (kernel-side)

def _excite_t(a_t, w1t_ref, aff1_ref, w2t_ref, aff2_ref):
    """Transposed-space excitation: gates for the channel rows covered by w2t_ref.

    a_t:        (C, N) f32 value  -- pooled activations, channels on sublanes, batch on lanes.
    w1t_ref:    (C/8, C)  ref     -- fc1 1x1-conv weight (PyTorch layout).
    aff1_ref:   (C/8, 3)  ref     -- columns [bias, gamma, beta] of fc1's conv-bias / BN1.
    w2t_ref:    (tc, C/8) ref     -- fc2 1x1-conv weight rows for this channel tile.
    aff2_ref:   (tc, 3)   ref     -- columns [bias, gamma, beta] for the same rows.
    Returns gate_t (tc, N) f32 in (0, 1).
    BatchNorm uses training-mode batch statistics over the batch (lane) axis with the centered,
    biased variance; gamma * rsqrt(var + eps) runs on the EUP.
    """
    y1 = jnp.dot(w1t_ref[...], a_t, preferred_element_type=jnp.float32) + aff1_ref[:, 0:1]
    m1 = jnp.mean(y1, axis=1, keepdims=True)
    v1 = jnp.mean((y1 - m1) ** 2, axis=1, keepdims=True)            # centered: no cancellation
    h1 = jnp.maximum(
        (y1 - m1) * (aff1_ref[:, 1:2] * jax.lax.rsqrt(v1 + BN_EPS)) + aff1_ref[:, 2:3], 0.0)

    y2 = jnp.dot(w2t_ref[...], h1, preferred_element_type=jnp.float32) + aff2_ref[:, 0:1]
    m2 = jnp.mean(y2, axis=1, keepdims=True)
    v2 = jnp.mean((y2 - m2) ** 2, axis=1, keepdims=True)
    h2 = jnp.maximum(
        (y2 - m2) * (aff2_ref[:, 1:2] * jax.lax.rsqrt(v2 + BN_EPS)) + aff2_ref[:, 2:3], 0.0)
    return 1.0 / (1.0 + jnp.exp(-h2))                                # (tc, N)


# ------------------------------------------------------------------ kernels

def _pool_kernel(x_ref, o_ref, *, inv_hw):
    """Row mean over the lane-dense H*W axis: (tm, HW) native dtype -> (tm, 1) f32."""
    o_ref[...] = jnp.sum(x_ref[...].astype(jnp.float32), axis=1, keepdims=True) * inv_hw


def _excite_scale_kernel(at_ref, w1t_ref, aff1_ref, w2t_ref, aff2_ref, x_ref, o_ref):
    """Fused excite + scale for one (batch, channel-tile) block of x.

    Grid is (C // tc, N).  The excite is recomputed per step (tiny MXU/VPU work) so every grid
    step is independent -> both axes can be 'parallel' and no cross-step scratch is needed.
    """
    bi = pl.program_id(1)                                             # batch element of this block

    gate_t = _excite_t(at_ref[...], w1t_ref, aff1_ref, w2t_ref, aff2_ref)   # (tc, N)

    # Pick column `bi` without any lane->sublane relayout: one-hot lane mask + lane reduction.
    lane = jax.lax.broadcasted_iota(jnp.int32, gate_t.shape, 1)
    g = jnp.sum(jnp.where(lane == bi, gate_t, 0.0), axis=1, keepdims=True)  # (tc, 1)

    o_ref[0] = (x_ref[0].astype(jnp.float32) * g).astype(o_ref.dtype)


def _se_fused_kernel(w1t_ref, aff1_ref, w2t_ref, aff2_ref, x_ref, o_ref, *, n_batch, inv_hw):
    """VMEM-resident fast path: pool + excite + scale with x read from HBM exactly once."""
    c = x_ref.shape[1]
    lane = jax.lax.broadcasted_iota(jnp.int32, (c, n_batch), 1)

    # Global average pool, assembled directly in the transposed (C, N) layout.
    a_t = jnp.zeros((c, n_batch), jnp.float32)
    for b in range(n_batch):
        col = jnp.sum(x_ref[b].astype(jnp.float32), axis=-1, keepdims=True) * inv_hw  # (C, 1)
        a_t = jnp.where(lane == b, col, a_t)

    gate_t = _excite_t(a_t, w1t_ref, aff1_ref, w2t_ref, aff2_ref)    # (C, N)

    for b in range(n_batch):
        g = jnp.sum(jnp.where(lane == b, gate_t, 0.0), axis=1, keepdims=True)         # (C, 1)
        o_ref[b] = (x_ref[b].astype(jnp.float32) * g).astype(o_ref.dtype)


# ------------------------------------------------------------------ wrappers / tiling helpers

def _vmem_capacity_bytes():
    try:
        return int(pltpu.get_tpu_info().vmem_capacity_bytes)
    except Exception:
        return 64 * 1024 * 1024


def _pick_tile(extent, row_bytes, target_bytes, want_multi):
    """Largest multiple-of-8 divisor of `extent` whose block stays <= target_bytes.

    Never falls back to the full extent for large tensors, and (when requested) keeps at least
    two grid steps so the 'parallel' axis actually shards across both v7x TensorCores.
    """
    assert extent % 8 == 0, "tiled SE path requires the tiled extent to be a multiple of 8"
    cap = max(8, int(target_bytes // max(row_bytes, 1)))
    cap = min(cap, extent)
    if want_multi and extent >= 16:
        cap = min(cap, extent // 2)
    tile = (cap // 8) * 8
    while tile > 8 and extent % tile != 0:
        tile -= 8
    return tile if extent % tile == 0 else 8


def _global_avg_pool(x2d, *, block_target):
    """x2d (M=N*C, HW) native dtype -> pooled (M, 1) f32, lane-dense tiles, auto-pipelined."""
    m, hw = x2d.shape
    tm = _pick_tile(m, hw * x2d.dtype.itemsize, block_target, want_multi=True)
    return pl.pallas_call(
        functools.partial(_pool_kernel, inv_hw=1.0 / float(hw)),
        out_shape=jax.ShapeDtypeStruct((m, 1), jnp.float32),
        grid=(m // tm,),
        in_specs=[pl.BlockSpec((tm, hw), lambda i: (i, 0))],
        out_specs=pl.BlockSpec((tm, 1), lambda i: (i, 0)),
        compiler_params=pltpu.CompilerParams(
            dimension_semantics=("parallel",),
            vmem_limit_bytes=32 * 1024 * 1024),
    )(x2d)


def _excite_scale(x3, a_t, params, *, block_target):
    """Fused excite + scale over x3 (N, C, HW); a_t is the pooled tensor in (C, N) layout."""
    n, c, hw = x3.shape
    cr = params["w1t"].shape[0]
    if c % 8 == 0:
        tc = _pick_tile(c, hw * x3.dtype.itemsize, block_target, want_multi=(n == 1))
    else:
        tc = c  # TODO(synk): pad the channel axis for C % 8 != 0 combined with huge spatial dims
    grid = (c // tc, n)
    return pl.pallas_call(
        _excite_scale_kernel,
        out_shape=jax.ShapeDtypeStruct((n, c, hw), x3.dtype),
        grid=grid,
        in_specs=[
            pl.BlockSpec((c, n), lambda ci, bi: (0, 0)),        # pooled (C, N): resident once
            pl.BlockSpec((cr, c), lambda ci, bi: (0, 0)),       # fc1 weight: resident once
            pl.BlockSpec((cr, 3), lambda ci, bi: (0, 0)),       # fc1 bias/BN affine
            pl.BlockSpec((tc, cr), lambda ci, bi: (ci, 0)),     # fc2 weight rows for this tile
            pl.BlockSpec((tc, 3), lambda ci, bi: (ci, 0)),      # fc2 bias/BN affine rows
            pl.BlockSpec((1, tc, hw), lambda ci, bi: (bi, ci, 0)),
        ],
        out_specs=pl.BlockSpec((1, tc, hw), lambda ci, bi: (bi, ci, 0)),
        compiler_params=pltpu.CompilerParams(
            dimension_semantics=("parallel", "parallel"),
            vmem_limit_bytes=32 * 1024 * 1024),
    )(a_t, params["w1t"], params["aff1"], params["w2t"], params["aff2"], x3)


# ------------------------------------------------------------------ forward

def init_se_params(key, channels):
    """Synthetic parameters matching nn.Conv2d(1x1)/nn.BatchNorm2d shapes (PyTorch weight layout).

    w1t = fc1 conv weight (C/8, C); w2t = fc2 conv weight (C, C/8);
    aff* pack [conv_bias, bn_gamma, bn_beta] as columns.
    """
    cr = channels // 8
    assert cr >= 1, "SE block requires channels >= 8 (channels // 8 squeeze)"
    k1, k2, k3, k4 = jax.random.split(key, 4)
    w1t = jax.random.normal(k1, (cr, channels), jnp.float32) * 0.1
    b1 = jax.random.normal(k2, (cr,), jnp.float32) * 0.1
    w2t = jax.random.normal(k3, (channels, cr), jnp.float32) * 0.1
    b2 = jax.random.normal(k4, (channels,), jnp.float32) * 0.1
    aff1 = jnp.stack([b1, jnp.ones((cr,), jnp.float32), jnp.zeros((cr,), jnp.float32)], axis=1)
    aff2 = jnp.stack([b2, jnp.ones((channels,), jnp.float32),
                      jnp.zeros((channels,), jnp.float32)], axis=1)
    return dict(w1t=w1t, w2t=w2t, aff1=aff1, aff2=aff2)


@functools.partial(jax.jit, static_argnames=("force_tiled",))
def se_forward(x_nchw, params, force_tiled=False):
    """Se.forward: sigmoid(fc2(fc1(avgpool(x)))) * x, NCHW in / NCHW out, output in x's dtype."""
    n, c, h, w = x_nchw.shape
    hw = h * w
    x3 = x_nchw.reshape(n, c, hw)        # free: NCHW is contiguous in H*W per (n, c) plane
    cap = _vmem_capacity_bytes()

    itemsize = x_nchw.dtype.itemsize
    small_bytes = sum(int(v.size) * v.dtype.itemsize for v in params.values()) + 8 * c * n
    resident_bytes = 2 * n * c * hw * itemsize + 3 * c * hw * 4 + small_bytes

    if (not force_tiled) and resident_bytes <= cap // 5:
        # VMEM-resident fast path: one kernel, x read once + written once (2x instead of 3x traffic).
        kernel = functools.partial(_se_fused_kernel, n_batch=n, inv_hw=1.0 / float(hw))
        out3 = pl.pallas_call(
            kernel,
            out_shape=jax.ShapeDtypeStruct((n, c, hw), x_nchw.dtype),
            compiler_params=pltpu.CompilerParams(vmem_limit_bytes=int(cap // 2)),
        )(params["w1t"], params["aff1"], params["w2t"], params["aff2"], x3)
        return out3.reshape(n, c, h, w)

    # Tiled/streaming path for large activations.
    assert c % 8 == 0, "tiled SE path requires channels % 8 == 0"  # TODO(synk): pad otherwise
    block_target = (4 << 20) if cap >= (96 << 20) else (2 << 20)   # bigger tiles on v5e/v6e

    x2d = x3.reshape(n * c, hw)
    pooled = _global_avg_pool(x2d, block_target=block_target)      # (N*C, 1) f32
    a_t = pooled.reshape(n, c).T                                    # (C, N): tiny XLA transpose
    out3 = _excite_scale(x3, a_t, params, block_target=block_target)
    return out3.reshape(n, c, h, w)


# ------------------------------------------------------------------ pure-JAX reference

def se_reference(x, params):
    w1 = params["w1t"].T                      # (C, C/8)
    w2 = params["w2t"].T                      # (C/8, C)
    b1, g1, be1 = (params["aff1"][:, k] for k in range(3))
    b2, g2, be2 = (params["aff2"][:, k] for k in range(3))

    a = jnp.mean(x.astype(jnp.float32), axis=(2, 3))                 # (N, C)
    y1 = a @ w1 + b1
    m1 = jnp.mean(y1, axis=0, keepdims=True)
    v1 = jnp.mean((y1 - m1) ** 2, axis=0, keepdims=True)
    h1 = jnp.maximum((y1 - m1) / jnp.sqrt(v1 + BN_EPS) * g1 + be1, 0.0)
    y2 = h1 @ w2 + b2
    m2 = jnp.mean(y2, axis=0, keepdims=True)
    v2 = jnp.mean((y2 - m2) ** 2, axis=0, keepdims=True)
    h2 = jnp.maximum((y2 - m2) / jnp.sqrt(v2 + BN_EPS) * g2 + be2, 0.0)
    gate = 1.0 / (1.0 + jnp.exp(-h2))                                # (N, C)
    return (x.astype(jnp.float32) * gate[:, :, None, None]).astype(x.dtype)


if __name__ == "__main__":
    key = jax.random.PRNGKey(0)
    kx, kp = jax.random.split(key)

    N, C, H, W = 2, 32, 16, 16            # channels must be >= 8 for the C -> C/8 squeeze
    x = jax.random.normal(kx, (N, C, H, W), jnp.float32)
    params = init_se_params(kp, C)

    ref = jax.block_until_ready(se_reference(x, params))
    out_fast = jax.block_until_ready(se_forward(x, params))                     # VMEM-resident path
    out_tiled = jax.block_until_ready(se_forward(x, params, force_tiled=True))  # streaming path

    for out in (out_fast, out_tiled):
        assert out.shape == (N, C, H, W)
        assert bool(jnp.all(jnp.isfinite(out)))
        assert bool(jnp.allclose(out, ref, rtol=2e-4, atol=2e-5))
    print("KERNEL_OK")
</pallas_src>

<mosaic_0001>
module attributes {stable_mosaic.version = 11 : i64} {
  func.func @_se_fused_kernel(%arg0: memref<4x32xf32, #tpu.memory_space<vmem>>, %arg1: memref<4x3xf32, #tpu.memory_space<vmem>>, %arg2: memref<32x4xf32, #tpu.memory_space<vmem>>, %arg3: memref<32x3xf32, #tpu.memory_space<vmem>>, %arg4: memref<2x32x256xf32, #tpu.memory_space<vmem>>, %arg5: memref<2x32x256xf32, #tpu.memory_space<vmem>>) attributes {dimension_semantics = [], scalar_prefetch = 0 : i64, scratch_operands = 0 : i64, tpu.core_type = #tpu.core_type<tc>} {
    %0 = tpu.iota {dimensions = array<i32: 1>} : vector<32x2xi32>
    %cst = arith.constant 0.000000e+00 : f32
    %1 = vector.broadcast %cst : f32 to vector<32x2xf32>
    %c0 = arith.constant 0 : index
    %c0_0 = arith.constant 0 : index
    %c0_1 = arith.constant 0 : index
    %2 = vector.load %arg4[%c0, %c0_0, %c0_1] : memref<2x32x256xf32, #tpu.memory_space<vmem>>, vector<1x32x256xf32>
    %3 = vector.shape_cast %2 : vector<1x32x256xf32> to vector<32x256xf32>
    %cst_2 = arith.constant dense<0.000000e+00> : vector<32xf32>
    %4 = vector.multi_reduction <add>, %3, %cst_2 [1] : vector<32x256xf32> to vector<32xf32>
    %5 = vector.shape_cast %4 : vector<32xf32> to vector<32x1xf32>
    %cst_3 = arith.constant 3.906250e-03 : f32
    %6 = vector.broadcast %cst_3 : f32 to vector<32x1xf32>
    %7 = arith.mulf %5, %6 : vector<32x1xf32>
    %c0_i32 = arith.constant 0 : i32
    %8 = vector.broadcast %c0_i32 : i32 to vector<32x2xi32>
    %9 = arith.cmpi eq, %0, %8 : vector<32x2xi32>
    %10 = vector.shape_cast %7 : vector<32x1xf32> to vector<32x1xf32>
    %11 = vector.broadcast %10 : vector<32x1xf32> to vector<32x2xf32>
    %12 = arith.select %9, %11, %1 : vector<32x2xi1>, vector<32x2xf32>
    %c1 = arith.constant 1 : index
    %c0_4 = arith.constant 0 : index
    %c0_5 = arith.constant 0 : index
    %13 = vector.load %arg4[%c1, %c0_4, %c0_5] : memref<2x32x256xf32, #tpu.memory_space<vmem>>, vector<1x32x256xf32>
    %14 = vector.shape_cast %13 : vector<1x32x256xf32> to vector<32x256xf32>
    %cst_6 = arith.constant dense<0.000000e+00> : vector<32xf32>
    %15 = vector.multi_reduction <add>, %14, %cst_6 [1] : vector<32x256xf32> to vector<32xf32>
    %16 = vector.shape_cast %15 : vector<32xf32> to vector<32x1xf32>
    %cst_7 = arith.constant 3.906250e-03 : f32
    %17 = vector.broadcast %cst_7 : f32 to vector<32x1xf32>
    %18 = arith.mulf %16, %17 : vector<32x1xf32>
    %c1_i32 = arith.constant 1 : i32
    %19 = vector.broadcast %c1_i32 : i32 to vector<32x2xi32>
    %20 = arith.cmpi eq, %0, %19 : vector<32x2xi32>
    %21 = vector.shape_cast %18 : vector<32x1xf32> to vector<32x1xf32>
    %22 = vector.broadcast %21 : vector<32x1xf32> to vector<32x2xf32>
    %23 = arith.select %20, %22, %12 : vector<32x2xi1>, vector<32x2xf32>
    %c0_8 = arith.constant 0 : index
    %c0_9 = arith.constant 0 : index
    %24 = vector.load %arg0[%c0_8, %c0_9] : memref<4x32xf32, #tpu.memory_space<vmem>>, vector<4x32xf32>
    %cst_10 = arith.constant dense<0.000000e+00> : vector<4x2xf32>
    %25 = tpu.matmul %24, %23, %cst_10 {dimension_numbers = #tpu.dot_dimension_numbers<[1], [0], [0], [1], [0, 0, 1, 1], [], []>} : vector<4x32xf32>, vector<32x2xf32>, vector<4x2xf32> -> vector<4x2xf32>
    %c0_11 = arith.constant 0 : index
    %c0_12 = arith.constant 0 : index
    %26 = vector.load %arg1[%c0_11, %c0_12] : memref<4x3xf32, #tpu.memory_space<vmem>>, vector<4x1xf32>
    %27 = vector.broadcast %26 : vector<4x1xf32> to vector<4x2xf32>
    %28 = arith.addf %25, %27 : vector<4x2xf32>
    %cst_13 = arith.constant dense<0.000000e+00> : vector<4xf32>
    %29 = vector.multi_reduction <add>, %28, %cst_13 [1] : vector<4x2xf32> to vector<4xf32>
    %30 = vector.shape_cast %29 : vector<4xf32> to vector<4x1xf32>
    %cst_14 = arith.constant 2.000000e+00 : f32
    %31 = vector.broadcast %cst_14 : f32 to vector<4x1xf32>
    %32 = arith.divf %30, %31 : vector<4x1xf32>
    %33 = vector.broadcast %32 : vector<4x1xf32> to vector<4x2xf32>
    %34 = arith.subf %28, %33 : vector<4x2xf32>
    %35 = arith.mulf %34, %34 : vector<4x2xf32>
    %cst_15 = arith.constant dense<0.000000e+00> : vector<4xf32>
    %36 = vector.multi_reduction <add>, %35, %cst_15 [1] : vector<4x2xf32> to vector<4xf32>
    %37 = vector.shape_cast %36 : vector<4xf32> to vector<4x1xf32>
    %cst_16 = arith.constant 2.000000e+00 : f32
    %38 = vector.broadcast %cst_16 : f32 to vector<4x1xf32>
    %39 = arith.divf %37, %38 : vector<4x1xf32>
    %40 = vector.broadcast %32 : vector<4x1xf32> to vector<4x2xf32>
    %41 = arith.subf %28, %40 : vector<4x2xf32>
    %c0_17 = arith.constant 0 : index
    %c1_18 = arith.constant 1 : index
    %42 = vector.load %arg1[%c0_17, %c1_18] : memref<4x3xf32, #tpu.memory_space<vmem>>, vector<4x1xf32>
    %cst_19 = arith.constant 9.99999974E-6 : f32
    %43 = vector.broadcast %cst_19 : f32 to vector<4x1xf32>
    %44 = arith.addf %39, %43 : vector<4x1xf32>
    %45 = math.rsqrt %44 : vector<4x1xf32>
    %46 = arith.mulf %42, %45 : vector<4x1xf32>
    %47 = vector.broadcast %46 : vector<4x1xf32> to vector<4x2xf32>
    %48 = arith.mulf %41, %47 : vector<4x2xf32>
    %c0_20 = arith.constant 0 : index
    %c2 = arith.constant 2 : index
    %49 = vector.load %arg1[%c0_20, %c2] : memref<4x3xf32, #tpu.memory_space<vmem>>, vector<4x1xf32>
    %50 = vector.broadcast %49 : vector<4x1xf32> to vector<4x2xf32>
    %51 = arith.addf %48, %50 : vector<4x2xf32>
    %cst_21 = arith.constant 0.000000e+00 : f32
    %52 = vector.broadcast %cst_21 : f32 to vector<4x2xf32>
    %53 = arith.maximumf %51, %52 : vector<4x2xf32>
    %c0_22 = arith.constant 0 : index
    %c0_23 = arith.constant 0 : index
    %54 = vector.load %arg2[%c0_22, %c0_23] : memref<32x4xf32, #tpu.memory_space<vmem>>, vector<32x4xf32>
    %cst_24 = arith.constant dense<0.000000e+00> : vector<32x2xf32>
    %55 = tpu.matmul %54, %53, %cst_24 {dimension_numbers = #tpu.dot_dimension_numbers<[1], [0], [0], [1], [0, 0, 1, 1], [], []>} : vector<32x4xf32>, vector<4x2xf32>, vector<32x2xf32> -> vector<32x2xf32>
    %c0_25 = arith.constant 0 : index
    %c0_26 = arith.constant 0 : index
    %56 = vector.load %arg3[%c0_25, %c0_26] : memref<32x3xf32, #tpu.memory_space<vmem>>, vector<32x1xf32>
    %57 = vector.broadcast %56 : vector<32x1xf32> to vector<32x2xf32>
    %58 = arith.addf %55, %57 : vector<32x2xf32>
    %cst_27 = arith.constant dense<0.000000e+00> : vector<32xf32>
    %59 = vector.multi_reduction <add>, %58, %cst_27 [1] : vector<32x2xf32> to vector<32xf32>
    %60 = vector.shape_cast %59 : vector<32xf32> to vector<32x1xf32>
    %cst_28 = arith.constant 2.000000e+00 : f32
    %61 = vector.broadcast %cst_28 : f32 to vector<32x1xf32>
    %62 = arith.divf %60, %61 : vector<32x1xf32>
    %63 = vector.broadcast %62 : vector<32x1xf32> to vector<32x2xf32>
    %64 = arith.subf %58, %63 : vector<32x2xf32>
    %65 = arith.mulf %64, %64 : vector<32x2xf32>
    %cst_29 = arith.constant dense<0.000000e+00> : vector<32xf32>
    %66 = vector.multi_reduction <add>, %65, %cst_29 [1] : vector<32x2xf32> to vector<32xf32>
    %67 = vector.shape_cast %66 : vector<32xf32> to vector<32x1xf32>
    %cst_30 = arith.constant 2.000000e+00 : f32
    %68 = vector.broadcast %cst_30 : f32 to vector<32x1xf32>
    %69 = arith.divf %67, %68 : vector<32x1xf32>
    %70 = vector.broadcast %62 : vector<32x1xf32> to vector<32x2xf32>
    %71 = arith.subf %58, %70 : vector<32x2xf32>
    %c0_31 = arith.constant 0 : index
    %c1_32 = arith.constant 1 : index
    %72 = vector.load %arg3[%c0_31, %c1_32] : memref<32x3xf32, #tpu.memory_space<vmem>>, vector<32x1xf32>
    %cst_33 = arith.constant 9.99999974E-6 : f32
    %73 = vector.broadcast %cst_33 : f32 to vector<32x1xf32>
    %74 = arith.addf %69, %73 : vector<32x1xf32>
    %75 = math.rsqrt %74 : vector<32x1xf32>
    %76 = arith.mulf %72, %75 : vector<32x1xf32>
    %77 = vector.broadcast %76 : vector<32x1xf32> to vector<32x2xf32>
    %78 = arith.mulf %71, %77 : vector<32x2xf32>
    %c0_34 = arith.constant 0 : index
    %c2_35 = arith.constant 2 : index
    %79 = vector.load %arg3[%c0_34, %c2_35] : memref<32x3xf32, #tpu.memory_space<vmem>>, vector<32x1xf32>
    %80 = vector.broadcast %79 : vector<32x1xf32> to vector<32x2xf32>
    %81 = arith.addf %78, %80 : vector<32x2xf32>
    %cst_36 = arith.constant 0.000000e+00 : f32
    %82 = vector.broadcast %cst_36 : f32 to vector<32x2xf32>
    %83 = arith.maximumf %81, %82 : vector<32x2xf32>
    %cst_37 = arith.constant 0.000000e+00 : f32
    %84 = vector.broadcast %cst_37 : f32 to vector<32x2xf32>
    %85 = arith.subf %84, %83 : vector<32x2xf32>
    %86 = math.exp %85 : vector<32x2xf32>
    %cst_38 = arith.constant 1.000000e+00 : f32
    %87 = vector.broadcast %cst_38 : f32 to vector<32x2xf32>
    %88 = arith.addf %87, %86 : vector<32x2xf32>
    %cst_39 = arith.constant 1.000000e+00 : f32
    %89 = vector.broadcast %cst_39 : f32 to vector<32x2xf32>
    %90 = arith.divf %89, %88 : vector<32x2xf32>
    %c0_i32_40 = arith.constant 0 : i32
    %91 = vector.broadcast %c0_i32_40 : i32 to vector<32x2xi32>
    %92 = arith.cmpi eq, %0, %91 : vector<32x2xi32>
    %cst_41 = arith.constant 0.000000e+00 : f32
    %93 = vector.broadcast %cst_41 : f32 to vector<32x2xf32>
    %94 = arith.select %92, %90, %93 : vector<32x2xi1>, vector<32x2xf32>
    %cst_42 = arith.constant dense<0.000000e+00> : vector<32xf32>
    %95 = vector.multi_reduction <add>, %94, %cst_42 [1] : vector<32x2xf32> to vector<32xf32>
    %96 = vector.shape_cast %95 : vector<32xf32> to vector<32x1xf32>
    %c0_43 = arith.constant 0 : index
    %c0_44 = arith.constant 0 : index
    %c0_45 = arith.constant 0 : index
    %97 = vector.load %arg4[%c0_43, %c0_44, %c0_45] : memref<2x32x256xf32, #tpu.memory_space<vmem>>, vector<1x32x256xf32>
    %98 = vector.shape_cast %97 : vector<1x32x256xf32> to vector<32x256xf32>
    %99 = vector.broadcast %96 : vector<32x1xf32> to vector<32x256xf32>
    %100 = arith.mulf %98, %99 : vector<32x256xf32>
    %c0_46 = arith.constant 0 : index
    %c0_47 = arith.constant 0 : index
    %c0_48 = arith.constant 0 : index
    %101 = vector.load %arg5[%c0_46, %c0_47, %c0_48] : memref<2x32x256xf32, #tpu.memory_space<vmem>>, vector<1x32x256xf32>
    %102 = vector.shape_cast %101 : vector<1x32x256xf32> to vector<32x256xf32>
    %103 = vector.shape_cast %100 : vector<32x256xf32> to vector<1x32x256xf32>
    tpu.vector_store %arg5[%c0_46, %c0_47, %c0_48], %103 {strides = array<i32>} : memref<2x32x256xf32, #tpu.memory_space<vmem>>, vector<1x32x256xf32>,
    %c1_i32_49 = arith.constant 1 : i32
    %104 = vector.broadcast %c1_i32_49 : i32 to vector<32x2xi32>
    %105 = arith.cmpi eq, %0, %104 : vector<32x2xi32>
    %cst_50 = arith.constant 0.000000e+00 : f32
    %106 = vector.broadcast %cst_50 : f32 to vector<32x2xf32>
    %107 = arith.select %105, %90, %106 : vector<32x2xi1>, vector<32x2xf32>
    %cst_51 = arith.constant dense<0.000000e+00> : vector<32xf32>
    %108 = vector.multi_reduction <add>, %107, %cst_51 [1] : vector<32x2xf32> to vector<32xf32>
    %109 = vector.shape_cast %108 : vector<32xf32> to vector<32x1xf32>
    %c1_52 = arith.constant 1 : index
    %c0_53 = arith.constant 0 : index
    %c0_54 = arith.constant 0 : index
    %110 = vector.load %arg4[%c1_52, %c0_53, %c0_54] : memref<2x32x256xf32, #tpu.memory_space<vmem>>, vector<1x32x256xf32>
    %111 = vector.shape_cast %110 : vector<1x32x256xf32> to vector<32x256xf32>
    %112 = vector.broadcast %109 : vector<32x1xf32> to vector<32x256xf32>
    %113 = arith.mulf %111, %112 : vector<32x256xf32>
    %c1_55 = arith.constant 1 : index
    %c0_56 = arith.constant 0 : index
    %c0_57 = arith.constant 0 : index
    %114 = vector.load %arg5[%c1_55, %c0_56, %c0_57] : memref<2x32x256xf32, #tpu.memory_space<vmem>>, vector<1x32x256xf32>
    %115 = vector.shape_cast %114 : vector<1x32x256xf32> to vector<32x256xf32>
    %116 = vector.shape_cast %113 : vector<32x256xf32> to vector<1x32x256xf32>
    tpu.vector_store %arg5[%c1_55, %c0_56, %c0_57], %116 {strides = array<i32>} : memref<2x32x256xf32, #tpu.memory_space<vmem>>, vector<1x32x256xf32>,
    return
  }
}

</mosaic_0001>

<llo_original>
// kernel: se_forward.1
$region0: #{se_forward.1}
  #allocation0 [shape = 'u32[]', space=smem, size = 0x4, offset = 0x4, fixed_abs, tag = 'smem constant byte address 0x4 - core index']
  #allocation1 [shape = 'u32[144,128]{1,0:T(1,128)}', space=vmem, size = 0x12000, scoped, tag = 'internal scratch']
  %s0 = inlined_call_operand.vmem [shape: f32[4,32], index: 0, kind: input, shape index: {}]
  %s1 = inlined_call_operand.vmem [shape: f32[4,3], index: 1, kind: input, shape index: {}]
  %s2 = inlined_call_operand.vmem [shape: f32[32,4], index: 2, kind: input, shape index: {}]
  %s3 = inlined_call_operand.vmem [shape: f32[32,3], index: 3, kind: input, shape index: {}]
  %s4 = inlined_call_operand.vmem [shape: f32[2,32,256], index: 4, kind: input, shape index: {}]
  %s5 = inlined_call_operand.vmem [shape: f32[2,32,256], index: 5, kind: output, shape index: {}]
  %s6 = sld [smem:[#allocation0]]
  $region30: #{se_forward.1} parent=0
    _
  %s8 = ssub.s32 1, %s6
  %s9 = scalar_select 0, %s8, %s6
  // Predicated region
  $region2: #{se_forward.1} parent=0 // pred_check
    _
  $region3: #{se_forward.1} parent=0 // pred_check_branch
    %11 = sbr.rel (0) target = $region5
  $region4: #{se_forward.1} parent=0 // pred_region
    _
  $region5: #{se_forward.1} parent=0 // pred_fallthru
    _
  // Predicated region
  $region6: #{se_forward.1} parent=0 // pred_check
    _
  $region7: #{se_forward.1} parent=0 // pred_check_branch
    %13 = sbr.rel (0) target = $region9
  $region8: #{se_forward.1} parent=0 // pred_region
    _
  $region9: #{se_forward.1} parent=0 // pred_fallthru
    _
  // Predicated region
  $region10: #{se_forward.1} parent=0 // pred_check
    _
  $region11: #{se_forward.1} parent=0 // pred_check_branch
    %15 = sbr.rel (0) target = $region13
  $region12: #{se_forward.1} parent=0 // pred_region
    _
  $region13: #{se_forward.1} parent=0 // pred_fallthru
    _
  // Predicated region
  $region14: #{se_forward.1} parent=0 // pred_check
    _
  $region15: #{se_forward.1} parent=0 // pred_check_branch
    %17 = sbr.rel (0) target = $region17
  $region16: #{se_forward.1} parent=0 // pred_region
    _
  $region17: #{se_forward.1} parent=0 // pred_fallthru
    _
  // Predicated region
  $region18: #{se_forward.1} parent=0 // pred_check
    _
  $region19: #{se_forward.1} parent=0 // pred_check_branch
    %19 = sbr.rel (0) target = $region21
  $region20: #{se_forward.1} parent=0 // pred_region
    _
  $region21: #{se_forward.1} parent=0 // pred_fallthru
    _
  %v20 = vlaneseq
  %v21 = vand.u32 %v20, 127
  %v22 = vld [vmem:[%s4] sm:$0xff]
  %v23 = vld [vmem:[%s4 + $0x8] sm:$0xff]
  %v24 = vld [vmem:[%s4 + $0x10] sm:$0xff]
  %v25 = vld [vmem:[%s4 + $0x18] sm:$0xff]
  %v26 = vld [vmem:[%s4 + $0x20] sm:$0xff]
  %v27 = vld [vmem:[%s4 + $0x28] sm:$0xff]
  %v28 = vld [vmem:[%s4 + $0x30] sm:$0xff]
  %v29 = vld [vmem:[%s4 + $0x38] sm:$0xff]
  %v30 = vadd.f32 %v22, %v23
  %31 = vadd.xlane.f32.xlu0 %v30
  %v32 = vpop.xlane.xlu0 %31
  %v33 = vadd.f32 %v24, %v25
  %34 = vadd.xlane.f32.xlu0 %v33
  %v35 = vpop.xlane.xlu0 %34
  %v36 = vadd.f32 %v26, %v27
  %37 = vadd.xlane.f32.xlu0 %v36
  %v38 = vpop.xlane.xlu0 %37
  %v39 = vadd.f32 %v28, %v29
  %40 = vadd.xlane.f32.xlu0 %v39
  %v41 = vpop.xlane.xlu0 %40
  %v42 = vmul.f32 %v32, 0.00390625
  %v43 = vmul.f32 %v35, 0.00390625
  %v44 = vmul.f32 %v38, 0.00390625
  %v45 = vmul.f32 %v41, 0.00390625
  %vm46 = vcmp.eq.s32.totalorder %v21, 0
  %v47 = vsel %vm46, %v42, 0.0
  %v48 = vsel %vm46, %v43, 0.0
  %v49 = vsel %vm46, %v44, 0.0
  %v50 = vsel %vm46, %v45, 0.0
  %s51 = scalar_lea.vmem %s4, 64
  %v52 = vld [vmem:[%s51] sm:$0xff]
  %v53 = vld [vmem:[%s51 + $0x8] sm:$0xff]
  %v54 = vld [vmem:[%s51 + $0x10] sm:$0xff]
  %v55 = vld [vmem:[%s51 + $0x18] sm:$0xff]
  %v56 = vld [vmem:[%s51 + $0x20] sm:$0xff]
  %v57 = vld [vmem:[%s51 + $0x28] sm:$0xff]
  %v58 = vld [vmem:[%s51 + $0x30] sm:$0xff]
  %v59 = vld [vmem:[%s51 + $0x38] sm:$0xff]
  %v60 = vadd.f32 %v52, %v53
  %61 = vadd.xlane.f32.xlu0 %v60
  %v62 = vpop.xlane.xlu0 %61
  %v63 = vadd.f32 %v54, %v55
  %64 = vadd.xlane.f32.xlu0 %v63
  %v65 = vpop.xlane.xlu0 %64
  %v66 = vadd.f32 %v56, %v57
  %67 = vadd.xlane.f32.xlu0 %v66
  %v68 = vpop.xlane.xlu0 %67
  %v69 = vadd.f32 %v58, %v59
  %70 = vadd.xlane.f32.xlu0 %v69
  %v71 = vpop.xlane.xlu0 %70
  %v72 = vmul.f32 %v62, 0.00390625
  %v73 = vmul.f32 %v65, 0.00390625
  %v74 = vmul.f32 %v68, 0.00390625
  %v75 = vmul.f32 %v71, 0.00390625
  %vm76 = vcmp.eq.s32.totalorder %v21, 1
  %v77 = vsel %vm76, %v72, %v47
  %v78 = vsel %vm76, %v73, %v48
  %v79 = vsel %vm76, %v74, %v49
  %v80 = vsel %vm76, %v75, %v50
  %v81 = vld [vmem:[%s0] sm:$0xf]
  %v82 = vld [vmem:[%s1] sm:$0xf]
  %84 = vset.pattern.permute.xlu0 0
  %85 = vperm.xlu0 %84, %v82
  %v86 = vpop.permute.xlu0 %85
  %vm88 = vcmask 261120
  %v90 = vsel %vm88, %v81, 0
  %92 = vmatprep.subr.mxu0 0.0
  %93 = vmatpush1.msra.mxu0 %v77
  %94 = vmatprep.subr.mxu0 0.0
  %95 = vmatpush1.msra.mxu0 %v78
  %96 = vmatprep.subr.mxu0 0.0
  %97 = vmatpush1.msra.mxu0 %v79
  %98 = vmatprep.subr.mxu0 0.0
  %99 = vmatpush1.msra.mxu0 %v80
  %100 = vmatprep.subr.mxu0 0.0
  %101 = vmatpush1.msra.mxu0 0.0
  %102 = vmatprep.subr.mxu0 0.0
  %103 = vmatpush1.msra.mxu0 0.0
  %104 = vmatprep.subr.mxu0 0.0
  %105 = vmatpush1.msra.mxu0 0.0
  %106 = vmatprep.subr.mxu0 0.0
  %107 = vmatpush1.msra.mxu0 0.0
  %108 = vmatprep.subr.mxu0 0.0
  %109 = vmatpush1.msra.mxu0 0.0
  %110 = vmatprep.subr.mxu0 0.0
  %111 = vmatpush1.msra.mxu0 0.0
  %112 = vmatprep.subr.mxu0 0.0
  %113 = vmatpush1.msra.mxu0 0.0
  %114 = vmatprep.subr.mxu0 0.0
  %115 = vmatpush1.msra.mxu0 0.0
  %116 = vmatprep.subr.mxu0 0.0
  %117 = vmatpush1.msra.mxu0 0.0
  %118 = vmatprep.subr.mxu0 0.0
  %119 = vmatpush1.msra.mxu0 0.0
  %120 = vmatprep.subr.mxu0 0.0
  %121 = vmatpush1.msra.mxu0 0.0
  %122 = vmatprep.subr.mxu0 0.0
  %123 = vmatpush1.msra.mxu0 0.0
  %124 = vmatprep.subr.mxu0 0.0
  %125 = vmatpush1.msra.mxu0 0.0
  %126 = vmatprep.subr.mxu0 0.0
  %127 = vmatpush1.msra.mxu0 0.0
  %128 = vmatprep.subr.mxu0 0.0
  %129 = vmatpush1.msra.mxu0 0.0
  %130 = vmatprep.subr.mxu0 0.0
  %131 = vmatpush1.msra.mxu0 0.0
  %132 = vmatprep.subr.mxu0 0.0
  %133 = vmatpush1.msra.mxu0 0.0
  %134 = vmatprep.subr.mxu0 0.0
  %135 = vmatpush1.msra.mxu0 0.0
  %136 = vmatprep.subr.mxu0 0.0
  %137 = vmatpush1.msra.mxu0 0.0
  %138 = vmatprep.subr.mxu0 0.0
  %139 = vmatpush1.msra.mxu0 0.0
  %140 = vmatprep.subr.mxu0 0.0
  %141 = vmatpush1.msra.mxu0 0.0
  %142 = vmatprep.subr.mxu0 0.0
  %143 = vmatpush1.msra.mxu0 0.0
  %144 = vmatprep.subr.mxu0 0.0
  %145 = vmatpush1.msra.mxu0 0.0
  %146 = vmatprep.subr.mxu0 0.0
  %147 = vmatpush1.msra.mxu0 0.0
  %148 = vmatprep.subr.mxu0 0.0
  %149 = vmatpush1.msra.mxu0 0.0
  %150 = vmatprep.subr.mxu0 0.0
  %151 = vmatpush1.msra.mxu0 0.0
  %152 = vmatprep.subr.mxu0 0.0
  %153 = vmatpush1.msra.mxu0 0.0
  %154 = vmatprep.subr.mxu0 0.0
  %155 = vmatpush1.msra.mxu0 0.0
  %156 = vmatprep.mubr.f32.mxu0 0.0
  %157 = vmatmul.mubr.f32.gmra.mrb[0].mxu0 %v90
  %v158 = vpop.f32.mrb[0].mxu0
  %v159 = vadd.f32 %v86, %v158
  %v160 = vpop.f32.mrb[0].mxu0
  %161 = vdwg.mxu0
  %vm162 = vcmask 11264
  %v163 = vsel %vm162, %v159, 0.0
  %164 = vadd.xlane.f32.xlu0 %v163
  %v165 = vpop.xlane.xlu0 %164
  %v166 = vrcp.pop 2.0
  %v167 = vmul.f32 %v165, %v166
  %v168 = vsub.f32 %v159, %v167
  %v169 = vmul.f32 %v168, %v168
  %v170 = vsel %vm162, %v169, 0.0
  %171 = vadd.xlane.f32.xlu0 %v170
  %v172 = vpop.xlane.xlu0 %171
  %v173 = vmul.f32 %v172, %v166
  %v174 = vadd.f32 %v173, 1e-05
  %v175 = vrsqrt.pop %v174
  %v176 = vmul.f32 %v82, %v175
  %178 = vset.pattern.permute.xlu0 1
  %179 = vperm.xlu0 %178, %v176
  %v180 = vpop.permute.xlu0 %179
  %v182 = vmul.f32 %v168, %v180
  %183 = vset.pattern.permute.xlu0 2
  %184 = vperm.xlu0 %183, %v82
  %v185 = vpop.permute.xlu0 %184
  %v187 = vadd.f32 %v182, %v185
  %v188 = vmax.f32 %v187, 0.0
  %v189 = vld [vmem:[%s2] sm:$0xff]
  %v190 = vld [vmem:[%s2 + $0x8] sm:$0xff]
  %v191 = vld [vmem:[%s2 + $0x10] sm:$0xff]
  %v192 = vld [vmem:[%s2 + $0x18] sm:$0xff]
  %v193 = vld [vmem:[%s3] sm:$0xff]
  %v194 = vld [vmem:[%s3 + $0x8] sm:$0xff]
  %v195 = vld [vmem:[%s3 + $0x10] sm:$0xff]
  %v196 = vld [vmem:[%s3 + $0x18] sm:$0xff]
  %198 = vset.pattern.permute.xlu0 0
  %199 = vperm.xlu0 %198, %v193
  %v200 = vpop.permute.xlu0 %199
  %203 = vset.pattern.permute.xlu0 0
  %204 = vperm.xlu0 %203, %v194
  %v205 = vpop.permute.xlu0 %204
  %208 = vset.pattern.permute.xlu0 0
  %209 = vperm.xlu0 %208, %v195
  %v210 = vpop.permute.xlu0 %209
  %213 = vset.pattern.permute.xlu0 0
  %214 = vperm.xlu0 %213, %v196
  %v215 = vpop.permute.xlu0 %214
  %vm217 = vcmask 31744
  %v219 = vsel %vm217, %v189, 0
  %v222 = vsel %vm217, %v190, 0
  %v225 = vsel %vm217, %v191, 0
  %v228 = vsel %vm217, %v192, 0
  %vm230 = vcmask 1043456
  %v232 = vsel %vm230, %v188, 0
  %234 = vmatprep.subr.mxu0 0.0
  %235 = vmatpush1.msra.mxu0 %v232
  %236 = vmatprep.subr.mxu0 0.0
  %237 = vmatpush1.msra.mxu0 0.0
  %238 = vmatprep.subr.mxu0 0.0
  %239 = vmatpush1.msra.mxu0 0.0
  %240 = vmatprep.subr.mxu0 0.0
  %241 = vmatpush1.msra.mxu0 0.0
  %242 = vmatprep.subr.mxu0 0.0
  %243 = vmatpush1.msra.mxu0 0.0
  %244 = vmatprep.subr.mxu0 0.0
  %245 = vmatpush1.msra.mxu0 0.0
  %246 = vmatprep.subr.mxu0 0.0
  %247 = vmatpush1.msra.mxu0 0.0
  %248 = vmatprep.subr.mxu0 0.0
  %249 = vmatpush1.msra.mxu0 0.0
  %250 = vmatprep.subr.mxu0 0.0
  %251 = vmatpush1.msra.mxu0 0.0
  %252 = vmatprep.subr.mxu0 0.0
  %253 = vmatpush1.msra.mxu0 0.0
  %254 = vmatprep.subr.mxu0 0.0
  %255 = vmatpush1.msra.mxu0 0.0
  %256 = vmatprep.subr.mxu0 0.0
  %257 = vmatpush1.msra.mxu0 0.0
  %258 = vmatprep.subr.mxu0 0.0
  %259 = vmatpush1.msra.mxu0 0.0
  %260 = vmatprep.subr.mxu0 0.0
  %261 = vmatpush1.msra.mxu0 0.0
  %262 = vmatprep.subr.mxu0 0.0
  %263 = vmatpush1.msra.mxu0 0.0
  %264 = vmatprep.subr.mxu0 0.0
  %265 = vmatpush1.msra.mxu0 0.0
  %266 = vmatprep.subr.mxu0 0.0
  %267 = vmatpush1.msra.mxu0 0.0
  %268 = vmatprep.subr.mxu0 0.0
  %269 = vmatpush1.msra.mxu0 0.0
  %270 = vmatprep.subr.mxu0 0.0
  %271 = vmatpush1.msra.mxu0 0.0
  %272 = vmatprep.subr.mxu0 0.0
  %273 = vmatpush1.msra.mxu0 0.0
  %274 = vmatprep.subr.mxu0 0.0
  %275 = vmatpush1.msra.mxu0 0.0
  %276 = vmatprep.subr.mxu0 0.0
  %277 = vmatpush1.msra.mxu0 0.0
  %278 = vmatprep.subr.mxu0 0.0
  %279 = vmatpush1.msra.mxu0 0.0
  %280 = vmatprep.subr.mxu0 0.0
  %281 = vmatpush1.msra.mxu0 0.0
  %282 = vmatprep.subr.mxu0 0.0
  %283 = vmatpush1.msra.mxu0 0.0
  %284 = vmatprep.subr.mxu0 0.0
  %285 = vmatpush1.msra.mxu0 0.0
  %286 = vmatprep.subr.mxu0 0.0
  %287 = vmatpush1.msra.mxu0 0.0
  %288 = vmatprep.subr.mxu0 0.0
  %289 = vmatpush1.msra.mxu0 0.0
  %290 = vmatprep.subr.mxu0 0.0
  %291 = vmatpush1.msra.mxu0 0.0
  %292 = vmatprep.subr.mxu0 0.0
  %293 = vmatpush1.msra.mxu0 0.0
  %294 = vmatprep.subr.mxu0 0.0
  %295 = vmatpush1.msra.mxu0 0.0
  %296 = vmatprep.subr.mxu0 0.0
  %297 = vmatpush1.msra.mxu0 0.0
  %298 = vmatprep.mubr.f32.mxu0 0.0
  %299 = vmatmul.mubr.f32.gmra.mrb[0].mxu0 %v219
  %v300 = vpop.f32.mrb[0].mxu0
  %v301 = vadd.f32 %v200, %v300
  %v302 = vpop.f32.mrb[0].mxu0
  %303 = vmatprep.mubr.f32.mxu0 0.0
  %304 = vmatmul.mubr.f32.gmra.mrb[0].mxu0 %v222
  %v305 = vpop.f32.mrb[0].mxu0
  %v306 = vadd.f32 %v205, %v305
  %v307 = vpop.f32.mrb[0].mxu0
  %308 = vmatprep.mubr.f32.mxu0 0.0
  %309 = vmatmul.mubr.f32.gmra.mrb[0].mxu0 %v225
  %v310 = vpop.f32.mrb[0].mxu0
  %v311 = vadd.f32 %v210, %v310
  %v312 = vpop.f32.mrb[0].mxu0
  %313 = vmatprep.mubr.f32.mxu0 0.0
  %314 = vmatmul.mubr.f32.gmra.mrb[0].mxu0 %v228
  %v315 = vpop.f32.mrb[0].mxu0
  %v316 = vadd.f32 %v215, %v315
  %v317 = vpop.f32.mrb[0].mxu0
  %318 = vdwg.mxu0
  %vm319 = vcmask 15360
  %v320 = vsel %vm319, %v301, 0.0
  %321 = vadd.xlane.f32.xlu0 %v320
  %v322 = vpop.xlane.xlu0 %321
  %v323 = vsel %vm319, %v306, 0.0
  %324 = vadd.xlane.f32.xlu0 %v323
  %v325 = vpop.xlane.xlu0 %324
  %v326 = vsel %vm319, %v311, 0.0
  %327 = vadd.xlane.f32.xlu0 %v326
  %v328 = vpop.xlane.xlu0 %327
  %v329 = vsel %vm319, %v316, 0.0
  %330 = vadd.xlane.f32.xlu0 %v329
  %v331 = vpop.xlane.xlu0 %330
  %v332 = vmul.f32 %v322, %v166
  %v333 = vmul.f32 %v325, %v166
  %v334 = vmul.f32 %v328, %v166
  %v335 = vmul.f32 %v331, %v166
  %v336 = vsub.f32 %v301, %v332
  %v337 = vsub.f32 %v306, %v333
  %v338 = vsub.f32 %v311, %v334
  %v339 = vsub.f32 %v316, %v335
  %v340 = vmul.f32 %v336, %v336
  %v341 = vmul.f32 %v337, %v337
  %v342 = vmul.f32 %v338, %v338
  %v343 = vmul.f32 %v339, %v339
  %v344 = vsel %vm319, %v340, 0.0
  %345 = vadd.xlane.f32.xlu0 %v344
  %v346 = vpop.xlane.xlu0 %345
  %v347 = vsel %vm319, %v341, 0.0
  %348 = vadd.xlane.f32.xlu0 %v347
  %v349 = vpop.xlane.xlu0 %348
  %v350 = vsel %vm319, %v342, 0.0
  %351 = vadd.xlane.f32.xlu0 %v350
  %v352 = vpop.xlane.xlu0 %351
  %v353 = vsel %vm319, %v343, 0.0
  %354 = vadd.xlane.f32.xlu0 %v353
  %v355 = vpop.xlane.xlu0 %354
  %v356 = vmul.f32 %v346, %v166
  %v357 = vmul.f32 %v349, %v166
  %v358 = vmul.f32 %v352, %v166
  %v359 = vmul.f32 %v355, %v166
  %v360 = vadd.f32 %v356, 1e-05
  %v361 = vadd.f32 %v357, 1e-05
  %v362 = vadd.f32 %v358, 1e-05
  %v363 = vadd.f32 %v359, 1e-05
  %v364 = vrsqrt.pop %v360
  %v365 = vrsqrt.pop %v361
  %v366 = vrsqrt.pop %v362
  %v367 = vrsqrt.pop %v363
  %v368 = vmul.f32 %v193, %v364
  %v369 = vmul.f32 %v194, %v365
  %v370 = vmul.f32 %v195, %v366
  %v371 = vmul.f32 %v196, %v367
  %373 = vset.pattern.permute.xlu0 1
  %374 = vperm.xlu0 %373, %v368
  %v375 = vpop.permute.xlu0 %374
  %378 = vset.pattern.permute.xlu0 1
  %379 = vperm.xlu0 %378, %v369
  %v380 = vpop.permute.xlu0 %379
  %383 = vset.pattern.permute.xlu0 1
  %384 = vperm.xlu0 %383, %v370
  %v385 = vpop.permute.xlu0 %384
  %388 = vset.pattern.permute.xlu0 1
  %389 = vperm.xlu0 %388, %v371
  %v390 = vpop.permute.xlu0 %389
  %v392 = vmul.f32 %v336, %v375
  %v393 = vmul.f32 %v337, %v380
  %v394 = vmul.f32 %v338, %v385
  %v395 = vmul.f32 %v339, %v390
  %396 = vset.pattern.permute.xlu0 2
  %397 = vperm.xlu0 %396, %v193
  %v398 = vpop.permute.xlu0 %397
  %400 = vset.pattern.permute.xlu0 2
  %401 = vperm.xlu0 %400, %v194
  %v402 = vpop.permute.xlu0 %401
  %404 = vset.pattern.permute.xlu0 2
  %405 = vperm.xlu0 %404, %v195
  %v406 = vpop.permute.xlu0 %405
  %408 = vset.pattern.permute.xlu0 2
  %409 = vperm.xlu0 %408, %v196
  %v410 = vpop.permute.xlu0 %409
  %v412 = vadd.f32 %v392, %v398
  %v413 = vadd.f32 %v393, %v402
  %v414 = vadd.f32 %v394, %v406
  %v415 = vadd.f32 %v395, %v410
  %v416 = vmax.f32 %v412, 0.0
  %v417 = vmax.f32 %v413, 0.0
  %v418 = vmax.f32 %v414, 0.0
  %v419 = vmax.f32 %v415, 0.0
  %v420 = vsub.f32 0.0, %v416
  %v421 = vsub.f32 0.0, %v417
  %v422 = vsub.f32 0.0, %v418
  %v423 = vsub.f32 0.0, %v419
  %v424 = vmul.f32 %v420, 1.442695
  %v425 = vpow.pop %v424
  %v426 = vmul.f32 %v421, 1.442695
  %v427 = vpow.pop %v426
  %v428 = vmul.f32 %v422, 1.442695
  %v429 = vpow.pop %v428
  %v430 = vmul.f32 %v423, 1.442695
  %v431 = vpow.pop %v430
  %v432 = vadd.f32 %v425, 1.0
  %v433 = vadd.f32 %v427, 1.0
  %v434 = vadd.f32 %v429, 1.0
  %v435 = vadd.f32 %v431, 1.0
  %v436 = vrcp.pop %v432
  %v437 = vmul.f32 1.0, %v436
  %v438 = vrcp.pop %v433
  %v439 = vmul.f32 1.0, %v438
  %v440 = vrcp.pop %v434
  %v441 = vmul.f32 1.0, %v440
  %v442 = vrcp.pop %v435
  %v443 = vmul.f32 1.0, %v442
  %v444 = vsel %vm46, %v437, 0.0
  %v445 = vsel %vm46, %v439, 0.0
  %v446 = vsel %vm46, %v441, 0.0
  %v447 = vsel %vm46, %v443, 0.0
  %v448 = vsel %vm319, %v444, 0.0
  %449 = vadd.xlane.f32.xlu0 %v448
  %v450 = vpop.xlane.xlu0 %449
  %v451 = vsel %vm319, %v445, 0.0
  %452 = vadd.xlane.f32.xlu0 %v451
  %v453 = vpop.xlane.xlu0 %452
  %v454 = vsel %vm319, %v446, 0.0
  %455 = vadd.xlane.f32.xlu0 %v454
  %v456 = vpop.xlane.xlu0 %455
  %v457 = vsel %vm319, %v447, 0.0
  %458 = vadd.xlane.f32.xlu0 %v457
  %v459 = vpop.xlane.xlu0 %458
  %v460 = vmul.f32 %v22, %v450
  %v461 = vmul.f32 %v23, %v450
  %v462 = vmul.f32 %v24, %v453
  %v463 = vmul.f32 %v25, %v453
  %v464 = vmul.f32 %v26, %v456
  %v465 = vmul.f32 %v27, %v456
  %v466 = vmul.f32 %v28, %v459
  %v467 = vmul.f32 %v29, %v459
  %468 = vst [vmem:[%s5] sm:$0xff] %v460
  %469 = vst [vmem:[%s5 + $0x8] sm:$0xff] %v461
  %470 = vst [vmem:[%s5 + $0x10] sm:$0xff] %v462
  %471 = vst [vmem:[%s5 + $0x18] sm:$0xff] %v463
  %472 = vst [vmem:[%s5 + $0x20] sm:$0xff] %v464
  %473 = vst [vmem:[%s5 + $0x28] sm:$0xff] %v465
  %474 = vst [vmem:[%s5 + $0x30] sm:$0xff] %v466
  %475 = vst [vmem:[%s5 + $0x38] sm:$0xff] %v467
  %v476 = vsel %vm76, %v437, 0.0
  %v477 = vsel %vm76, %v439, 0.0
  %v478 = vsel %vm76, %v441, 0.0
  %v479 = vsel %vm76, %v443, 0.0
  %v480 = vsel %vm319, %v476, 0.0
  %481 = vadd.xlane.f32.xlu0 %v480
  %v482 = vpop.xlane.xlu0 %481
  %v483 = vsel %vm319, %v477, 0.0
  %484 = vadd.xlane.f32.xlu0 %v483
  %v485 = vpop.xlane.xlu0 %484
  %v486 = vsel %vm319, %v478, 0.0
  %487 = vadd.xlane.f32.xlu0 %v486
  %v488 = vpop.xlane.xlu0 %487
  %v489 = vsel %vm319, %v479, 0.0
  %490 = vadd.xlane.f32.xlu0 %v489
  %v491 = vpop.xlane.xlu0 %490
  %v492 = vld [vmem:[%s51] sm:$0xff]
  %v493 = vld [vmem:[%s51 + $0x8] sm:$0xff]
  %v494 = vld [vmem:[%s51 + $0x10] sm:$0xff]
  %v495 = vld [vmem:[%s51 + $0x18] sm:$0xff]
  %v496 = vld [vmem:[%s51 + $0x20] sm:$0xff]
  %v497 = vld [vmem:[%s51 + $0x28] sm:$0xff]
  %v498 = vld [vmem:[%s51 + $0x30] sm:$0xff]
  %v499 = vld [vmem:[%s51 + $0x38] sm:$0xff]
  %v500 = vmul.f32 %v492, %v482
  %v501 = vmul.f32 %v493, %v482
  %v502 = vmul.f32 %v494, %v485
  %v503 = vmul.f32 %v495, %v485
  %v504 = vmul.f32 %v496, %v488
  %v505 = vmul.f32 %v497, %v488
  %v506 = vmul.f32 %v498, %v491
  %v507 = vmul.f32 %v499, %v491
  %s508 = scalar_lea.vmem %s5, 64
  %509 = vst [vmem:[%s508] sm:$0xff] %v500
  %510 = vst [vmem:[%s508 + $0x8] sm:$0xff] %v501
  %511 = vst [vmem:[%s508 + $0x10] sm:$0xff] %v502
  %512 = vst [vmem:[%s508 + $0x18] sm:$0xff] %v503
  %513 = vst [vmem:[%s508 + $0x20] sm:$0xff] %v504
  %514 = vst [vmem:[%s508 + $0x28] sm:$0xff] %v505
  %515 = vst [vmem:[%s508 + $0x30] sm:$0xff] %v506
  %516 = vst [vmem:[%s508 + $0x38] sm:$0xff] %v507
  // Predicated region
  $region22: #{se_forward.1} parent=0 // pred_check
    _
  $region23: #{se_forward.1} parent=0 // pred_check_branch
    %518 = sbr.rel (0) target = $region25
  $region24: #{se_forward.1} parent=0 // pred_region
    _
  $region25: #{se_forward.1} parent=0 // pred_fallthru
    _
  // Predicated region
  $region26: #{se_forward.1} parent=0 // pred_check
    _
  $region27: #{se_forward.1} parent=0 // pred_check_branch
    %520 = sbr.rel (0) target = $region29
  $region28: #{se_forward.1} parent=0 // pred_region
    _
  $region29: #{se_forward.1} parent=0 // pred_fallthru
    _

</llo_original>
